<compile_context>
chip_gen: v7x
topology: tpu7x:2x2x1
jax: 0.10.0
libtpu: 0.0.40
codegen_flags: <defaults>
</compile_context>

<pallas_src>
import functools

import jax
import jax.numpy as jnp
from jax.experimental import pallas as pl
from jax.experimental.pallas import tpu as pltpu


def mlp_kernel(x_ref, w1_ref, b1_ref, w2_ref, b2_ref,
               w3_ref, b3_ref, w4_ref, b4_ref, o_ref, *, approx_sigmoid):
    x = x_ref[...]
    # Layer 1..3: MXU matmuls, f32 accumulation; bias + ReLU in f32 (VPU).
    h = jnp.dot(x, w1_ref[...], preferred_element_type=jnp.float32)
    h = jnp.maximum(h + b1_ref[...], 0.0)
    h = jnp.dot(h.astype(w2_ref.dtype), w2_ref[...], preferred_element_type=jnp.float32)
    h = jnp.maximum(h + b2_ref[...], 0.0)
    h = jnp.dot(h.astype(w3_ref.dtype), w3_ref[...], preferred_element_type=jnp.float32)
    h = jnp.maximum(h + b3_ref[...], 0.0)
    # Layer 4 (32 -> 1): N=1 uses 1/128..1/256 of MXU columns; do it as a VPU
    # multiply + lane reduction (XLU) instead.  w4_ref is the (1, 32) row.
    z = jnp.sum(h * w4_ref[...], axis=-1, keepdims=True) + b4_ref[...]
    # Sigmoid: exp rides the EUP; approx reciprocal keeps the epilogue off the VPU divide.
    e = jnp.exp(-z)
    if approx_sigmoid:
        sig = pl.reciprocal(1.0 + e, approx=True)
    else:
        sig = 1.0 / (1.0 + e)
    o_ref[...] = sig.astype(o_ref.dtype)


def mlp_forward(x, params, *, block_b=None, use_bf16=True, approx_sigmoid=None):
    """x: (B, F) float32; params: (w1,b1,...,w4,b4) with w_l (in,out), b_l (1,out)."""
    B, F = x.shape
    w1, b1, w2, b2, w3, b3, w4, b4 = params
    if approx_sigmoid is None:
        approx_sigmoid = use_bf16

    mm_dtype = jnp.bfloat16 if use_bf16 else jnp.float32
    xk = x.astype(mm_dtype)
    w1k = w1.astype(mm_dtype)
    w2k = w2.astype(mm_dtype)
    w3k = w3.astype(mm_dtype)
    w4_row = w4.reshape(1, -1).astype(jnp.float32)   # (1, 32) for the VPU/XLU final layer

    if block_b is None:
        # Target ~4 MiB per x tile (double-buffered by the pipeline), multiple of 8 rows.
        tgt = (4 << 20) // max(F * jnp.dtype(mm_dtype).itemsize, 1)
        block_b = max(8, min(2048, (tgt // 8) * 8))
    block_b = int(min(block_b, max(8, ((B + 7) // 8) * 8)))
    grid = (pl.cdiv(B, block_b),)

    # Scoped VMEM budget: double-buffered x/out tiles + resident weights/biases +
    # f32 intermediates, plus headroom; keep well under v7x's 64 MiB physical VMEM.
    tile_bytes = block_b * F * jnp.dtype(mm_dtype).itemsize + block_b * 4
    resident = sum(int(a.size) * a.dtype.itemsize
                   for a in (w1k, b1, w2k, b2, w3k, b3, w4_row, b4))
    interm = block_b * (128 + 64 + 32) * 4
    vmem_limit = int(min(max(2 * tile_bytes + resident + 2 * interm + (4 << 20),
                             16 << 20), 48 << 20))

    flops = 2 * B * (F * 128 + 128 * 64 + 64 * 32 + 32 * 1)
    bytes_accessed = int(xk.size) * xk.dtype.itemsize + resident + B * 4
    cost = pl.CostEstimate(flops=flops, transcendentals=2 * B,
                           bytes_accessed=bytes_accessed)

    def full_spec(a):
        nd = a.ndim
        return pl.BlockSpec(a.shape, lambda i, _nd=nd: (0,) * _nd)

    kern = functools.partial(mlp_kernel, approx_sigmoid=approx_sigmoid)
    return pl.pallas_call(
        kern,
        out_shape=jax.ShapeDtypeStruct((B, 1), jnp.float32),
        grid_spec=pltpu.PrefetchScalarGridSpec(
            num_scalar_prefetch=0,
            grid=grid,
            in_specs=[
                pl.BlockSpec((block_b, F), lambda i: (i, 0)),   # x tiled over batch
                full_spec(w1k), full_spec(b1),
                full_spec(w2k), full_spec(b2),
                full_spec(w3k), full_spec(b3),
                full_spec(w4_row), full_spec(b4),
            ],
            out_specs=pl.BlockSpec((block_b, 1), lambda i: (i, 0)),
        ),
        compiler_params=pltpu.CompilerParams(
            dimension_semantics=("parallel",),
            vmem_limit_bytes=vmem_limit),
        cost_estimate=cost,
    )(xk, w1k, b1, w2k, b2, w3k, b3, w4_row, b4)


def init_params(key, number_of_features):
    """Deterministic init mimicking PyTorch nn.Linear default (uniform +-1/sqrt(fan_in))."""
    dims = [number_of_features, 128, 64, 32, 1]
    params = []
    for i in range(4):
        fan_in, fan_out = dims[i], dims[i + 1]
        key, kw, kb = jax.random.split(key, 3)
        bound = 1.0 / jnp.sqrt(float(fan_in))
        w = jax.random.uniform(kw, (fan_in, fan_out), jnp.float32, -bound, bound)
        b = jax.random.uniform(kb, (1, fan_out), jnp.float32, -bound, bound)
        params.extend([w, b])
    return tuple(params)


def mlp_reference(x, params):
    w1, b1, w2, b2, w3, b3, w4, b4 = params
    h = jnp.maximum(x @ w1 + b1, 0.0)
    h = jnp.maximum(h @ w2 + b2, 0.0)
    h = jnp.maximum(h @ w3 + b3, 0.0)
    return jax.nn.sigmoid(h @ w4 + b4)


# TODO(synk): training path (BCELoss, Adam, fit/save/load) is host-side PyTorch logic
# with no Pallas equivalent; only the forward pass is implemented here.

if __name__ == "__main__":
    key = jax.random.PRNGKey(0)
    F = 32  # number_of_features
    key, kx = jax.random.split(key)
    params = init_params(key, F)

    # 1) Exact f32 path (single tile) -> strict numerical check against reference.
    x_small = jax.random.normal(kx, (8, F), jnp.float32)
    out_exact = jax.block_until_ready(
        mlp_forward(x_small, params, use_bf16=False, approx_sigmoid=False))
    ref_small = mlp_reference(x_small, params)
    assert out_exact.shape == (8, 1)
    assert bool(jnp.all((out_exact > 0.0) & (out_exact < 1.0)))
    assert bool(jnp.allclose(out_exact, ref_small, atol=1e-5, rtol=1e-5))

    # 2) Fast bf16 + approx-sigmoid path, multi-step grid with a partial last tile
    #    (exercises pipelining and masked output writeback) -> loose tolerance.
    key, kx2 = jax.random.split(key)
    x_big = jax.random.normal(kx2, (20, F), jnp.float32)
    out_fast = jax.block_until_ready(
        mlp_forward(x_big, params, block_b=8, use_bf16=True))
    ref_big = mlp_reference(x_big, params)
    assert out_fast.shape == (20, 1)
    assert bool(jnp.all(jnp.isfinite(out_fast)))
    assert bool(jnp.allclose(out_fast, ref_big, atol=3e-2, rtol=3e-2))

    print("KERNEL_OK")
</pallas_src>

<mosaic_0001>
module attributes {stable_mosaic.version = 11 : i64} {
  func.func @mlp_kernel(%arg0: i32, %arg1: memref<8x32xf32, #tpu.memory_space<vmem>>, %arg2: memref<32x128xf32, #tpu.memory_space<vmem>>, %arg3: memref<1x128xf32, #tpu.memory_space<vmem>>, %arg4: memref<128x64xf32, #tpu.memory_space<vmem>>, %arg5: memref<1x64xf32, #tpu.memory_space<vmem>>, %arg6: memref<64x32xf32, #tpu.memory_space<vmem>>, %arg7: memref<1x32xf32, #tpu.memory_space<vmem>>, %arg8: memref<1x32xf32, #tpu.memory_space<vmem>>, %arg9: memref<1x1xf32, #tpu.memory_space<vmem>>, %arg10: memref<8x1xf32, #tpu.memory_space<vmem>>) attributes {dimension_semantics = [#tpu.dimension_semantics<parallel>], iteration_bounds = array<i64: 1>, scalar_prefetch = 0 : i64, scratch_operands = 0 : i64, tpu.core_type = #tpu.core_type<tc>, window_params = [{transform_indices = @transform_0, window_bounds = array<i64: 8, 32>}, {pipeline_mode = #tpu.pipeline_mode<synchronous>, transform_indices = @transform_1, window_bounds = array<i64: 32, 128>}, {pipeline_mode = #tpu.pipeline_mode<synchronous>, transform_indices = @transform_2, window_bounds = array<i64: 1, 128>}, {pipeline_mode = #tpu.pipeline_mode<synchronous>, transform_indices = @transform_3, window_bounds = array<i64: 128, 64>}, {pipeline_mode = #tpu.pipeline_mode<synchronous>, transform_indices = @transform_4, window_bounds = array<i64: 1, 64>}, {pipeline_mode = #tpu.pipeline_mode<synchronous>, transform_indices = @transform_5, window_bounds = array<i64: 64, 32>}, {pipeline_mode = #tpu.pipeline_mode<synchronous>, transform_indices = @transform_6, window_bounds = array<i64: 1, 32>}, {pipeline_mode = #tpu.pipeline_mode<synchronous>, transform_indices = @transform_7, window_bounds = array<i64: 1, 32>}, {pipeline_mode = #tpu.pipeline_mode<synchronous>, transform_indices = @transform_8, window_bounds = array<i64: 1, 1>}, {transform_indices = @transform_9, window_bounds = array<i64: 8, 1>}]} {
    %c0 = arith.constant 0 : index
    %c0_0 = arith.constant 0 : index
    %0 = vector.load %arg1[%c0, %c0_0] : memref<8x32xf32, #tpu.memory_space<vmem>>, vector<8x32xf32>
    %c0_1 = arith.constant 0 : index
    %c0_2 = arith.constant 0 : index
    %1 = vector.load %arg2[%c0_1, %c0_2] : memref<32x128xf32, #tpu.memory_space<vmem>>, vector<32x128xf32>
    %cst = arith.constant dense<0.000000e+00> : vector<8x128xf32>
    %2 = tpu.matmul %0, %1, %cst {dimension_numbers = #tpu.dot_dimension_numbers<[1], [0], [0], [1], [0, 0, 1, 1], [], []>} : vector<8x32xf32>, vector<32x128xf32>, vector<8x128xf32> -> vector<8x128xf32>
    %c0_3 = arith.constant 0 : index
    %c0_4 = arith.constant 0 : index
    %3 = vector.load %arg3[%c0_3, %c0_4] : memref<1x128xf32, #tpu.memory_space<vmem>>, vector<1x128xf32>
    %4 = vector.broadcast %3 : vector<1x128xf32> to vector<8x128xf32>
    %5 = arith.addf %2, %4 : vector<8x128xf32>
    %cst_5 = arith.constant 0.000000e+00 : f32
    %6 = vector.broadcast %cst_5 : f32 to vector<8x128xf32>
    %7 = arith.maximumf %5, %6 : vector<8x128xf32>
    %c0_6 = arith.constant 0 : index
    %c0_7 = arith.constant 0 : index
    %8 = vector.load %arg4[%c0_6, %c0_7] : memref<128x64xf32, #tpu.memory_space<vmem>>, vector<128x64xf32>
    %cst_8 = arith.constant dense<0.000000e+00> : vector<8x64xf32>
    %9 = tpu.matmul %7, %8, %cst_8 {dimension_numbers = #tpu.dot_dimension_numbers<[1], [0], [0], [1], [0, 0, 1, 1], [], []>} : vector<8x128xf32>, vector<128x64xf32>, vector<8x64xf32> -> vector<8x64xf32>
    %c0_9 = arith.constant 0 : index
    %c0_10 = arith.constant 0 : index
    %10 = vector.load %arg5[%c0_9, %c0_10] : memref<1x64xf32, #tpu.memory_space<vmem>>, vector<1x64xf32>
    %11 = vector.broadcast %10 : vector<1x64xf32> to vector<8x64xf32>
    %12 = arith.addf %9, %11 : vector<8x64xf32>
    %cst_11 = arith.constant 0.000000e+00 : f32
    %13 = vector.broadcast %cst_11 : f32 to vector<8x64xf32>
    %14 = arith.maximumf %12, %13 : vector<8x64xf32>
    %c0_12 = arith.constant 0 : index
    %c0_13 = arith.constant 0 : index
    %15 = vector.load %arg6[%c0_12, %c0_13] : memref<64x32xf32, #tpu.memory_space<vmem>>, vector<64x32xf32>
    %cst_14 = arith.constant dense<0.000000e+00> : vector<8x32xf32>
    %16 = tpu.matmul %14, %15, %cst_14 {dimension_numbers = #tpu.dot_dimension_numbers<[1], [0], [0], [1], [0, 0, 1, 1], [], []>} : vector<8x64xf32>, vector<64x32xf32>, vector<8x32xf32> -> vector<8x32xf32>
    %c0_15 = arith.constant 0 : index
    %c0_16 = arith.constant 0 : index
    %17 = vector.load %arg7[%c0_15, %c0_16] : memref<1x32xf32, #tpu.memory_space<vmem>>, vector<1x32xf32>
    %18 = vector.broadcast %17 : vector<1x32xf32> to vector<8x32xf32>
    %19 = arith.addf %16, %18 : vector<8x32xf32>
    %cst_17 = arith.constant 0.000000e+00 : f32
    %20 = vector.broadcast %cst_17 : f32 to vector<8x32xf32>
    %21 = arith.maximumf %19, %20 : vector<8x32xf32>
    %c0_18 = arith.constant 0 : index
    %c0_19 = arith.constant 0 : index
    %22 = vector.load %arg8[%c0_18, %c0_19] : memref<1x32xf32, #tpu.memory_space<vmem>>, vector<1x32xf32>
    %23 = vector.broadcast %22 : vector<1x32xf32> to vector<8x32xf32>
    %24 = arith.mulf %21, %23 : vector<8x32xf32>
    %cst_20 = arith.constant dense<0.000000e+00> : vector<8xf32>
    %25 = vector.multi_reduction <add>, %24, %cst_20 [1] : vector<8x32xf32> to vector<8xf32>
    %26 = vector.shape_cast %25 : vector<8xf32> to vector<8x1xf32>
    %c0_21 = arith.constant 0 : index
    %c0_22 = arith.constant 0 : index
    %27 = vector.load %arg9[%c0_21, %c0_22] : memref<1x1xf32, #tpu.memory_space<vmem>>, vector<1x1xf32>
    %28 = vector.broadcast %27 : vector<1x1xf32> to vector<8x1xf32>
    %29 = arith.addf %26, %28 : vector<8x1xf32>
    %cst_23 = arith.constant 0.000000e+00 : f32
    %30 = vector.broadcast %cst_23 : f32 to vector<8x1xf32>
    %31 = arith.subf %30, %29 : vector<8x1xf32>
    %32 = math.exp %31 : vector<8x1xf32>
    %cst_24 = arith.constant 1.000000e+00 : f32
    %33 = vector.broadcast %cst_24 : f32 to vector<8x1xf32>
    %34 = arith.addf %33, %32 : vector<8x1xf32>
    %cst_25 = arith.constant 1.000000e+00 : f32
    %35 = vector.broadcast %cst_25 : f32 to vector<8x1xf32>
    %36 = arith.divf %35, %34 : vector<8x1xf32>
    %c0_26 = arith.constant 0 : index
    %c0_27 = arith.constant 0 : index
    %37 = vector.load %arg10[%c0_26, %c0_27] : memref<8x1xf32, #tpu.memory_space<vmem>>, vector<8x1xf32>
    tpu.vector_store %arg10[%c0_26, %c0_27], %36 {strides = array<i32>} : memref<8x1xf32, #tpu.memory_space<vmem>>, vector<8x1xf32>,
    return
  }
  func.func @transform_0(%arg0: i32) -> (i32, i32) {
    %c0_i32 = arith.constant 0 : i32
    %c0_i32_0 = arith.constant 0 : i32
    return %arg0, %c0_i32 : i32, i32
  }
  func.func @transform_1(%arg0: i32) -> (i32, i32) {
    %c0_i32 = arith.constant 0 : i32
    %c0_i32_0 = arith.constant 0 : i32
    %c0_i32_1 = arith.constant 0 : i32
    return %c0_i32, %c0_i32_0 : i32, i32
  }
  func.func @transform_2(%arg0: i32) -> (i32, i32) {
    %c0_i32 = arith.constant 0 : i32
    %c0_i32_0 = arith.constant 0 : i32
    %c0_i32_1 = arith.constant 0 : i32
    return %c0_i32, %c0_i32_0 : i32, i32
  }
  func.func @transform_3(%arg0: i32) -> (i32, i32) {
    %c0_i32 = arith.constant 0 : i32
    %c0_i32_0 = arith.constant 0 : i32
    %c0_i32_1 = arith.constant 0 : i32
    return %c0_i32, %c0_i32_0 : i32, i32
  }
  func.func @transform_4(%arg0: i32) -> (i32, i32) {
    %c0_i32 = arith.constant 0 : i32
    %c0_i32_0 = arith.constant 0 : i32
    %c0_i32_1 = arith.constant 0 : i32
    return %c0_i32, %c0_i32_0 : i32, i32
  }
  func.func @transform_5(%arg0: i32) -> (i32, i32) {
    %c0_i32 = arith.constant 0 : i32
    %c0_i32_0 = arith.constant 0 : i32
    %c0_i32_1 = arith.constant 0 : i32
    return %c0_i32, %c0_i32_0 : i32, i32
  }
  func.func @transform_6(%arg0: i32) -> (i32, i32) {
    %c0_i32 = arith.constant 0 : i32
    %c0_i32_0 = arith.constant 0 : i32
    %c0_i32_1 = arith.constant 0 : i32
    return %c0_i32, %c0_i32_0 : i32, i32
  }
  func.func @transform_7(%arg0: i32) -> (i32, i32) {
    %c0_i32 = arith.constant 0 : i32
    %c0_i32_0 = arith.constant 0 : i32
    %c0_i32_1 = arith.constant 0 : i32
    return %c0_i32, %c0_i32_0 : i32, i32
  }
  func.func @transform_8(%arg0: i32) -> (i32, i32) {
    %c0_i32 = arith.constant 0 : i32
    %c0_i32_0 = arith.constant 0 : i32
    %c0_i32_1 = arith.constant 0 : i32
    return %c0_i32, %c0_i32_0 : i32, i32
  }
  func.func @transform_9(%arg0: i32) -> (i32, i32) {
    %c0_i32 = arith.constant 0 : i32
    %c0_i32_0 = arith.constant 0 : i32
    return %arg0, %c0_i32 : i32, i32
  }
}

</mosaic_0001>

<llo_original>
// kernel: tpu_custom_call.1
$region0: #{tpu_custom_call.1}
  #allocation0 [shape = 'u32[]', space=smem, size = 0x4, offset = 0x4, fixed_abs, tag = 'smem constant byte address 0x4 - core index']
  #allocation1 [shape = 'u32[144,128]{1,0:T(1,128)}', space=vmem, size = 0x12000, scoped, tag = 'internal scratch']
  #allocation2 [shape = 'f32[1,1]{1,0:T(1,128)S(1)}', space=vmem, size = 0x200, scoped, tag = 'scoped memory for tpu_custom_call.1']
  %s0 = inlined_call_operand.vmem [shape: f32[8,32], index: 0, kind: input, shape index: {}]
  %s1 = inlined_call_operand.vmem [shape: f32[32,128], index: 1, kind: input, shape index: {}]
  %s2 = inlined_call_operand.vmem [shape: f32[1,128], index: 2, kind: input, shape index: {}]
  %s3 = inlined_call_operand.vmem [shape: f32[128,64], index: 3, kind: input, shape index: {}]
  %s4 = inlined_call_operand.vmem [shape: f32[1,64], index: 4, kind: input, shape index: {}]
  %s5 = inlined_call_operand.vmem [shape: f32[64,32], index: 5, kind: input, shape index: {}]
  %s6 = inlined_call_operand.vmem [shape: f32[1,32], index: 6, kind: input, shape index: {}]
  %s7 = inlined_call_operand.vmem [shape: f32[1,32], index: 7, kind: input, shape index: {}]
  %s8 = inlined_call_operand.<no memory space> [shape: f32[1,1], index: 8, kind: input, shape index: {}]
  %s9 = inlined_call_operand.vmem [shape: f32[8,1], index: 9, kind: output, shape index: {}]
  %s10 = sld [smem:[#allocation0]]
  $region46: #{tpu_custom_call.1} parent=0
    _
  %s12 = ssub.s32 1, %s10
  %s13 = scalar_select 0, %s12, %s10
  %v14 = vstv %s8
  %15 = vst [vmem:[#allocation2] sm:$0x1] %v14
  // Predicated region
  $region2: #{tpu_custom_call.1} parent=0 // pred_check
    _
  $region3: #{tpu_custom_call.1} parent=0 // pred_check_branch
    %17 = sbr.rel (0) target = $region5
  $region4: #{tpu_custom_call.1} parent=0 // pred_region
    _
  $region5: #{tpu_custom_call.1} parent=0 // pred_fallthru
    _
  // Predicated region
  $region6: #{tpu_custom_call.1} parent=0 // pred_check
    _
  $region7: #{tpu_custom_call.1} parent=0 // pred_check_branch
    %19 = sbr.rel (0) target = $region9
  $region8: #{tpu_custom_call.1} parent=0 // pred_region
    _
  $region9: #{tpu_custom_call.1} parent=0 // pred_fallthru
    _
  // Predicated region
  $region10: #{tpu_custom_call.1} parent=0 // pred_check
    _
  $region11: #{tpu_custom_call.1} parent=0 // pred_check_branch
    %21 = sbr.rel (0) target = $region13
  $region12: #{tpu_custom_call.1} parent=0 // pred_region
    _
  $region13: #{tpu_custom_call.1} parent=0 // pred_fallthru
    _
  // Predicated region
  $region14: #{tpu_custom_call.1} parent=0 // pred_check
    _
  $region15: #{tpu_custom_call.1} parent=0 // pred_check_branch
    %23 = sbr.rel (0) target = $region17
  $region16: #{tpu_custom_call.1} parent=0 // pred_region
    _
  $region17: #{tpu_custom_call.1} parent=0 // pred_fallthru
    _
  // Predicated region
  $region18: #{tpu_custom_call.1} parent=0 // pred_check
    _
  $region19: #{tpu_custom_call.1} parent=0 // pred_check_branch
    %25 = sbr.rel (0) target = $region21
  $region20: #{tpu_custom_call.1} parent=0 // pred_region
    _
  $region21: #{tpu_custom_call.1} parent=0 // pred_fallthru
    _
  // Predicated region
  $region22: #{tpu_custom_call.1} parent=0 // pred_check
    _
  $region23: #{tpu_custom_call.1} parent=0 // pred_check_branch
    %27 = sbr.rel (0) target = $region25
  $region24: #{tpu_custom_call.1} parent=0 // pred_region
    _
  $region25: #{tpu_custom_call.1} parent=0 // pred_fallthru
    _
  // Predicated region
  $region26: #{tpu_custom_call.1} parent=0 // pred_check
    _
  $region27: #{tpu_custom_call.1} parent=0 // pred_check_branch
    %29 = sbr.rel (0) target = $region29
  $region28: #{tpu_custom_call.1} parent=0 // pred_region
    _
  $region29: #{tpu_custom_call.1} parent=0 // pred_fallthru
    _
  // Predicated region
  $region30: #{tpu_custom_call.1} parent=0 // pred_check
    _
  $region31: #{tpu_custom_call.1} parent=0 // pred_check_branch
    %31 = sbr.rel (0) target = $region33
  $region32: #{tpu_custom_call.1} parent=0 // pred_region
    _
  $region33: #{tpu_custom_call.1} parent=0 // pred_fallthru
    _
  // Predicated region
  $region34: #{tpu_custom_call.1} parent=0 // pred_check
    _
  $region35: #{tpu_custom_call.1} parent=0 // pred_check_branch
    %33 = sbr.rel (0) target = $region37
  $region36: #{tpu_custom_call.1} parent=0 // pred_region
    _
  $region37: #{tpu_custom_call.1} parent=0 // pred_fallthru
    _
  %v34 = vld [vmem:[%s0] sm:$0xff]
  %v35 = vld [vmem:[%s1] sm:$0xff]
  %v36 = vld [vmem:[%s1 + $0x8] sm:$0xff]
  %v37 = vld [vmem:[%s1 + $0x10] sm:$0xff]
  %v38 = vld [vmem:[%s1 + $0x18] sm:$0xff]
  %v39 = vld [vmem:[%s2] sm:$0x1]
  %v41 = vlaneseq
  %v42 = vshrl.u32 %v41, 7
  %v43 = vsub.s32 0, %v42
  %v44 = vrot.slane %v39, %v43
  %vm46 = vcmask 261120
  %v48 = vsel %vm46, %v34, 0
  %50 = vmatprep.subr.mxu0 0.0
  %51 = vmatpush1.msra.mxu0 %v35
  %52 = vmatprep.subr.mxu0 0.0
  %53 = vmatpush1.msra.mxu0 %v36
  %54 = vmatprep.subr.mxu0 0.0
  %55 = vmatpush1.msra.mxu0 %v37
  %56 = vmatprep.subr.mxu0 0.0
  %57 = vmatpush1.msra.mxu0 %v38
  %58 = vmatprep.subr.mxu0 0.0
  %59 = vmatpush1.msra.mxu0 0.0
  %60 = vmatprep.subr.mxu0 0.0
  %61 = vmatpush1.msra.mxu0 0.0
  %62 = vmatprep.subr.mxu0 0.0
  %63 = vmatpush1.msra.mxu0 0.0
  %64 = vmatprep.subr.mxu0 0.0
  %65 = vmatpush1.msra.mxu0 0.0
  %66 = vmatprep.subr.mxu0 0.0
  %67 = vmatpush1.msra.mxu0 0.0
  %68 = vmatprep.subr.mxu0 0.0
  %69 = vmatpush1.msra.mxu0 0.0
  %70 = vmatprep.subr.mxu0 0.0
  %71 = vmatpush1.msra.mxu0 0.0
  %72 = vmatprep.subr.mxu0 0.0
  %73 = vmatpush1.msra.mxu0 0.0
  %74 = vmatprep.subr.mxu0 0.0
  %75 = vmatpush1.msra.mxu0 0.0
  %76 = vmatprep.subr.mxu0 0.0
  %77 = vmatpush1.msra.mxu0 0.0
  %78 = vmatprep.subr.mxu0 0.0
  %79 = vmatpush1.msra.mxu0 0.0
  %80 = vmatprep.subr.mxu0 0.0
  %81 = vmatpush1.msra.mxu0 0.0
  %82 = vmatprep.subr.mxu0 0.0
  %83 = vmatpush1.msra.mxu0 0.0
  %84 = vmatprep.subr.mxu0 0.0
  %85 = vmatpush1.msra.mxu0 0.0
  %86 = vmatprep.subr.mxu0 0.0
  %87 = vmatpush1.msra.mxu0 0.0
  %88 = vmatprep.subr.mxu0 0.0
  %89 = vmatpush1.msra.mxu0 0.0
  %90 = vmatprep.subr.mxu0 0.0
  %91 = vmatpush1.msra.mxu0 0.0
  %92 = vmatprep.subr.mxu0 0.0
  %93 = vmatpush1.msra.mxu0 0.0
  %94 = vmatprep.subr.mxu0 0.0
  %95 = vmatpush1.msra.mxu0 0.0
  %96 = vmatprep.subr.mxu0 0.0
  %97 = vmatpush1.msra.mxu0 0.0
  %98 = vmatprep.subr.mxu0 0.0
  %99 = vmatpush1.msra.mxu0 0.0
  %100 = vmatprep.subr.mxu0 0.0
  %101 = vmatpush1.msra.mxu0 0.0
  %102 = vmatprep.subr.mxu0 0.0
  %103 = vmatpush1.msra.mxu0 0.0
  %104 = vmatprep.subr.mxu0 0.0
  %105 = vmatpush1.msra.mxu0 0.0
  %106 = vmatprep.subr.mxu0 0.0
  %107 = vmatpush1.msra.mxu0 0.0
  %108 = vmatprep.subr.mxu0 0.0
  %109 = vmatpush1.msra.mxu0 0.0
  %110 = vmatprep.subr.mxu0 0.0
  %111 = vmatpush1.msra.mxu0 0.0
  %112 = vmatprep.subr.mxu0 0.0
  %113 = vmatpush1.msra.mxu0 0.0
  %114 = vmatprep.mubr.f32.mxu0 0.0
  %115 = vmatmul.mubr.f32.gmra.mrb[0].mxu0 %v48
  %v116 = vpop.f32.mrb[0].mxu0
  %v117 = vadd.f32 %v44, %v116
  %v118 = vpop.f32.mrb[0].mxu0
  %119 = vdwg.mxu0
  %v120 = vmax.f32 %v117, 0.0
  %v121 = vld [vmem:[%s3] sm:$0xff]
  %v122 = vld [vmem:[%s3 + $0x8] sm:$0xff]
  %v123 = vld [vmem:[%s3 + $0x10] sm:$0xff]
  %v124 = vld [vmem:[%s3 + $0x18] sm:$0xff]
  %v125 = vld [vmem:[%s3 + $0x20] sm:$0xff]
  %v126 = vld [vmem:[%s3 + $0x28] sm:$0xff]
  %v127 = vld [vmem:[%s3 + $0x30] sm:$0xff]
  %v128 = vld [vmem:[%s3 + $0x38] sm:$0xff]
  %v129 = vld [vmem:[%s3 + $0x40] sm:$0xff]
  %v130 = vld [vmem:[%s3 + $0x48] sm:$0xff]
  %v131 = vld [vmem:[%s3 + $0x50] sm:$0xff]
  %v132 = vld [vmem:[%s3 + $0x58] sm:$0xff]
  %v133 = vld [vmem:[%s3 + $0x60] sm:$0xff]
  %v134 = vld [vmem:[%s3 + $0x68] sm:$0xff]
  %v135 = vld [vmem:[%s3 + $0x70] sm:$0xff]
  %v136 = vld [vmem:[%s3 + $0x78] sm:$0xff]
  %v137 = vld [vmem:[%s4] sm:$0x1]
  %v139 = vlaneseq
  %v140 = vshrl.u32 %v139, 7
  %v141 = vsub.s32 0, %v140
  %v142 = vrot.slane %v137, %v141
  %144 = vmatprep.subr.mxu0 0.0
  %145 = vmatpush1.msra.mxu0 %v121
  %146 = vmatprep.subr.mxu0 0.0
  %147 = vmatpush1.msra.mxu0 %v122
  %148 = vmatprep.subr.mxu0 0.0
  %149 = vmatpush1.msra.mxu0 %v123
  %150 = vmatprep.subr.mxu0 0.0
  %151 = vmatpush1.msra.mxu0 %v124
  %152 = vmatprep.subr.mxu0 0.0
  %153 = vmatpush1.msra.mxu0 %v125
  %154 = vmatprep.subr.mxu0 0.0
  %155 = vmatpush1.msra.mxu0 %v126
  %156 = vmatprep.subr.mxu0 0.0
  %157 = vmatpush1.msra.mxu0 %v127
  %158 = vmatprep.subr.mxu0 0.0
  %159 = vmatpush1.msra.mxu0 %v128
  %160 = vmatprep.subr.mxu0 0.0
  %161 = vmatpush1.msra.mxu0 %v129
  %162 = vmatprep.subr.mxu0 0.0
  %163 = vmatpush1.msra.mxu0 %v130
  %164 = vmatprep.subr.mxu0 0.0
  %165 = vmatpush1.msra.mxu0 %v131
  %166 = vmatprep.subr.mxu0 0.0
  %167 = vmatpush1.msra.mxu0 %v132
  %168 = vmatprep.subr.mxu0 0.0
  %169 = vmatpush1.msra.mxu0 %v133
  %170 = vmatprep.subr.mxu0 0.0
  %171 = vmatpush1.msra.mxu0 %v134
  %172 = vmatprep.subr.mxu0 0.0
  %173 = vmatpush1.msra.mxu0 %v135
  %174 = vmatprep.subr.mxu0 0.0
  %175 = vmatpush1.msra.mxu0 %v136
  %176 = vmatprep.subr.mxu0 0.0
  %177 = vmatpush1.msra.mxu0 0.0
  %178 = vmatprep.subr.mxu0 0.0
  %179 = vmatpush1.msra.mxu0 0.0
  %180 = vmatprep.subr.mxu0 0.0
  %181 = vmatpush1.msra.mxu0 0.0
  %182 = vmatprep.subr.mxu0 0.0
  %183 = vmatpush1.msra.mxu0 0.0
  %184 = vmatprep.subr.mxu0 0.0
  %185 = vmatpush1.msra.mxu0 0.0
  %186 = vmatprep.subr.mxu0 0.0
  %187 = vmatpush1.msra.mxu0 0.0
  %188 = vmatprep.subr.mxu0 0.0
  %189 = vmatpush1.msra.mxu0 0.0
  %190 = vmatprep.subr.mxu0 0.0
  %191 = vmatpush1.msra.mxu0 0.0
  %192 = vmatprep.subr.mxu0 0.0
  %193 = vmatpush1.msra.mxu0 0.0
  %194 = vmatprep.subr.mxu0 0.0
  %195 = vmatpush1.msra.mxu0 0.0
  %196 = vmatprep.subr.mxu0 0.0
  %197 = vmatpush1.msra.mxu0 0.0
  %198 = vmatprep.subr.mxu0 0.0
  %199 = vmatpush1.msra.mxu0 0.0
  %200 = vmatprep.subr.mxu0 0.0
  %201 = vmatpush1.msra.mxu0 0.0
  %202 = vmatprep.subr.mxu0 0.0
  %203 = vmatpush1.msra.mxu0 0.0
  %204 = vmatprep.subr.mxu0 0.0
  %205 = vmatpush1.msra.mxu0 0.0
  %206 = vmatprep.subr.mxu0 0.0
  %207 = vmatpush1.msra.mxu0 0.0
  %208 = vmatprep.mubr.f32.mxu0 0.0
  %209 = vmatmul.mubr.f32.gmra.mrb[0].mxu0 %v120
  %v210 = vpop.f32.mrb[0].mxu0
  %v211 = vadd.f32 %v142, %v210
  %v212 = vpop.f32.mrb[0].mxu0
  %213 = vdwg.mxu0
  %v214 = vmax.f32 %v211, 0.0
  %v215 = vld [vmem:[%s5] sm:$0xff]
  %v216 = vld [vmem:[%s5 + $0x8] sm:$0xff]
  %v217 = vld [vmem:[%s5 + $0x10] sm:$0xff]
  %v218 = vld [vmem:[%s5 + $0x18] sm:$0xff]
  %v219 = vld [vmem:[%s5 + $0x20] sm:$0xff]
  %v220 = vld [vmem:[%s5 + $0x28] sm:$0xff]
  %v221 = vld [vmem:[%s5 + $0x30] sm:$0xff]
  %v222 = vld [vmem:[%s5 + $0x38] sm:$0xff]
  %v223 = vld [vmem:[%s6] sm:$0x1]
  %v225 = vlaneseq
  %v226 = vshrl.u32 %v225, 7
  %v227 = vsub.s32 0, %v226
  %v228 = vrot.slane %v223, %v227
  %vm230 = vcmask 523264
  %v232 = vsel %vm230, %v214, 0
  %234 = vmatprep.subr.mxu0 0.0
  %235 = vmatpush1.msra.mxu0 %v215
  %236 = vmatprep.subr.mxu0 0.0
  %237 = vmatpush1.msra.mxu0 %v216
  %238 = vmatprep.subr.mxu0 0.0
  %239 = vmatpush1.msra.mxu0 %v217
  %240 = vmatprep.subr.mxu0 0.0
  %241 = vmatpush1.msra.mxu0 %v218
  %242 = vmatprep.subr.mxu0 0.0
  %243 = vmatpush1.msra.mxu0 %v219
  %244 = vmatprep.subr.mxu0 0.0
  %245 = vmatpush1.msra.mxu0 %v220
  %246 = vmatprep.subr.mxu0 0.0
  %247 = vmatpush1.msra.mxu0 %v221
  %248 = vmatprep.subr.mxu0 0.0
  %249 = vmatpush1.msra.mxu0 %v222
  %250 = vmatprep.subr.mxu0 0.0
  %251 = vmatpush1.msra.mxu0 0.0
  %252 = vmatprep.subr.mxu0 0.0
  %253 = vmatpush1.msra.mxu0 0.0
  %254 = vmatprep.subr.mxu0 0.0
  %255 = vmatpush1.msra.mxu0 0.0
  %256 = vmatprep.subr.mxu0 0.0
  %257 = vmatpush1.msra.mxu0 0.0
  %258 = vmatprep.subr.mxu0 0.0
  %259 = vmatpush1.msra.mxu0 0.0
  %260 = vmatprep.subr.mxu0 0.0
  %261 = vmatpush1.msra.mxu0 0.0
  %262 = vmatprep.subr.mxu0 0.0
  %263 = vmatpush1.msra.mxu0 0.0
  %264 = vmatprep.subr.mxu0 0.0
  %265 = vmatpush1.msra.mxu0 0.0
  %266 = vmatprep.subr.mxu0 0.0
  %267 = vmatpush1.msra.mxu0 0.0
  %268 = vmatprep.subr.mxu0 0.0
  %269 = vmatpush1.msra.mxu0 0.0
  %270 = vmatprep.subr.mxu0 0.0
  %271 = vmatpush1.msra.mxu0 0.0
  %272 = vmatprep.subr.mxu0 0.0
  %273 = vmatpush1.msra.mxu0 0.0
  %274 = vmatprep.subr.mxu0 0.0
  %275 = vmatpush1.msra.mxu0 0.0
  %276 = vmatprep.subr.mxu0 0.0
  %277 = vmatpush1.msra.mxu0 0.0
  %278 = vmatprep.subr.mxu0 0.0
  %279 = vmatpush1.msra.mxu0 0.0
  %280 = vmatprep.subr.mxu0 0.0
  %281 = vmatpush1.msra.mxu0 0.0
  %282 = vmatprep.subr.mxu0 0.0
  %283 = vmatpush1.msra.mxu0 0.0
  %284 = vmatprep.subr.mxu0 0.0
  %285 = vmatpush1.msra.mxu0 0.0
  %286 = vmatprep.subr.mxu0 0.0
  %287 = vmatpush1.msra.mxu0 0.0
  %288 = vmatprep.subr.mxu0 0.0
  %289 = vmatpush1.msra.mxu0 0.0
  %290 = vmatprep.subr.mxu0 0.0
  %291 = vmatpush1.msra.mxu0 0.0
  %292 = vmatprep.subr.mxu0 0.0
  %293 = vmatpush1.msra.mxu0 0.0
  %294 = vmatprep.subr.mxu0 0.0
  %295 = vmatpush1.msra.mxu0 0.0
  %296 = vmatprep.subr.mxu0 0.0
  %297 = vmatpush1.msra.mxu0 0.0
  %298 = vmatprep.mubr.f32.mxu0 0.0
  %299 = vmatmul.mubr.f32.gmra.mrb[0].mxu0 %v232
  %v300 = vpop.f32.mrb[0].mxu0
  %v301 = vadd.f32 %v228, %v300
  %v302 = vpop.f32.mrb[0].mxu0
  %303 = vdwg.mxu0
  %v304 = vmax.f32 %v301, 0.0
  %v305 = vld [vmem:[%s7] sm:$0x1]
  %v307 = vlaneseq
  %v308 = vshrl.u32 %v307, 7
  %v309 = vsub.s32 0, %v308
  %v310 = vrot.slane %v305, %v309
  %v312 = vmul.f32 %v304, %v310
  %v313 = vsel %vm46, %v312, 0.0
  %314 = vadd.xlane.f32.xlu0 %v313
  %v315 = vpop.xlane.xlu0 %314
  %v316 = vld [vmem:[#allocation2] sm:$0x1]
  %v318 = vlaneseq
  %v319 = vshrl.u32 %v318, 7
  %v320 = vsub.s32 0, %v319
  %v321 = vrot.slane %v316, %v320
  %v323 = vadd.f32 %v315, %v321
  %v324 = vsub.f32 0.0, %v323
  %v325 = vmul.f32 %v324, 1.442695
  %v326 = vpow.pop %v325
  %v327 = vadd.f32 %v326, 1.0
  %v328 = vrcp.pop %v327
  %v329 = vmul.f32 1.0, %v328
  %vm330 = vcmask 7168
  %331 = vst.msk [vmem:[%s9] sm:$0xff] %vm330, %v329
  // Predicated region
  $region38: #{tpu_custom_call.1} parent=0 // pred_check
    _
  $region39: #{tpu_custom_call.1} parent=0 // pred_check_branch
    %333 = sbr.rel (0) target = $region41
  $region40: #{tpu_custom_call.1} parent=0 // pred_region
    _
  $region41: #{tpu_custom_call.1} parent=0 // pred_fallthru
    _
  // Predicated region
  $region42: #{tpu_custom_call.1} parent=0 // pred_check
    _
  $region43: #{tpu_custom_call.1} parent=0 // pred_check_branch
    %335 = sbr.rel (0) target = $region45
  $region44: #{tpu_custom_call.1} parent=0 // pred_region
    _
  $region45: #{tpu_custom_call.1} parent=0 // pred_fallthru
    _

</llo_original>
